<compile_context>
chip_gen: v7x
topology: tpu7x:2x2x1
jax: 0.10.0
libtpu: 0.0.40
codegen_flags: <defaults>
</compile_context>

<pallas_src>
import jax
import jax.numpy as jnp
from jax.experimental import pallas as pl
from jax.experimental.pallas import tpu as pltpu

_LANES = 512  # lane-dense last dim (large multiple of 128 -> unmasked full-width vst)


def _round_up(x, m):
    return ((x + m - 1) // m) * m


def _chip_tuning():
    """Return (target_tile_bytes, min_grid_steps) for the local TPU generation."""
    try:
        kind = jax.devices()[0].device_kind.lower()
    except Exception:  # pragma: no cover - defensive; fall back to v5e-safe tiles
        kind = ""
    if "v7" in kind:
        # ~3.2 TB/s per TC: 6 MiB tiles cut per-step overhead to ~6-8%;
        # 6 MiB x 2 buffers x (in + out) = 24 MiB < 32 MiB scoped default.
        # min 2 grid steps so the "parallel" axis shards across both TCs.
        return 6 * 1024 * 1024, 2
    if "v6" in kind:
        # 4 MiB x 2 buffers x (in + out) = 16 MiB < 32 MiB scoped default.
        return 4 * 1024 * 1024, 1
    # v5e (16 MiB scoped default) and unknown chips: stay at 2 MiB tiles.
    return 2 * 1024 * 1024, 1


def _linreg_kernel(w_ref, b_ref, x_ref, o_ref):
    # w_ref / b_ref: SMEM scalars of shape (1,); x_ref / o_ref: VMEM tiles.
    x = x_ref[...].astype(jnp.float32)
    o_ref[...] = (w_ref[0] * x + b_ref[0]).astype(o_ref.dtype)


def linear_regression_forward(x, weight, bias):
    """out = weight * x + bias (scalar broadcast) for any-shape x."""
    orig_shape = x.shape
    # Stream native floating dtypes (halves input HBM bytes for bf16/f16);
    # non-float inputs are upcast once to f32 (matches torch float promotion).
    if not jnp.issubdtype(x.dtype, jnp.floating):
        x = x.astype(jnp.float32)
    out_dtype = x.dtype
    itemsize = jnp.dtype(out_dtype).itemsize
    sublane_align = max(8, 32 // itemsize)  # (8,128) f32, (16,128) bf16, ...

    weight = jnp.asarray(weight, jnp.float32).reshape(1)
    bias = jnp.asarray(bias, jnp.float32).reshape(1)

    flat = x.reshape(-1)
    n = flat.shape[0]

    # Lane-dense slab: (rows_lane, 512).  Only pad when numel isn't a multiple
    # of 512 (< one row of padding); the reshape is free otherwise.
    rows_lane = pl.cdiv(n, _LANES)
    padded_n = rows_lane * _LANES
    if padded_n != n:
        # TODO(synk): mask the ragged <512-element tail in-kernel to avoid this
        # extra pad/slice pass (only reached when numel % 512 != 0).
        flat = jnp.pad(flat, (0, padded_n - n))
    slab = flat.reshape(rows_lane, _LANES)

    tile_bytes, min_steps = _chip_tuning()
    target_rows = max(sublane_align, tile_bytes // (_LANES * itemsize))

    num_tiles = pl.cdiv(rows_lane, target_rows)
    slab_bytes = rows_lane * _LANES * itemsize
    if num_tiles < min_steps and slab_bytes > 2 * 1024 * 1024:
        num_tiles = min_steps  # v7x: let both TensorCores stream

    if num_tiles == 1:
        # Single block equal to the full array dims (allowed regardless of the
        # (8,128) divisibility rule) -> zero per-step overhead for small inputs.
        tile_rows = rows_lane
    else:
        # Balanced tiles; the final block may be partial and Pallas masks it,
        # so at most (sublane_align - 1) rows of the last block are wasted.
        tile_rows = _round_up(pl.cdiv(rows_lane, num_tiles), sublane_align)

    grid = (pl.cdiv(rows_lane, tile_rows),)

    out_slab = pl.pallas_call(
        _linreg_kernel,
        out_shape=jax.ShapeDtypeStruct((rows_lane, _LANES), out_dtype),
        grid_spec=pltpu.PrefetchScalarGridSpec(
            num_scalar_prefetch=0,
            grid=grid,
            in_specs=[
                pl.BlockSpec(memory_space=pltpu.MemorySpace.SMEM),    # weight
                pl.BlockSpec(memory_space=pltpu.MemorySpace.SMEM),    # bias
                pl.BlockSpec((tile_rows, _LANES), lambda i: (i, 0)),  # x tile
            ],
            out_specs=pl.BlockSpec((tile_rows, _LANES), lambda i: (i, 0)),
        ),
        compiler_params=pltpu.CompilerParams(
            # Row-tile axis is fully independent -> shardable across v7x's two
            # TensorCores; harmless no-op on single-TC v5e/v6e.
            dimension_semantics=("parallel",),
        ),
        cost_estimate=pl.CostEstimate(
            flops=2 * padded_n,
            transcendentals=0,
            bytes_accessed=2 * padded_n * itemsize,
        ),
    )(weight, bias, slab)

    out = out_slab.reshape(-1)
    if padded_n != n:
        out = out[:n]
    return out.reshape(orig_shape)


if __name__ == "__main__":
    # Deterministic parameter init, matching the module's __init__ defaults.
    initial_weight = -10.0
    initial_bias = 50.0
    weight = jnp.array([initial_weight], dtype=jnp.float32)  # shape [1]
    bias = jnp.array([initial_bias], dtype=jnp.float32)      # shape [1]

    # Small deterministic demo input (single-block fast path).
    key = jax.random.PRNGKey(0)
    x = jax.random.normal(key, (128, 128), dtype=jnp.float32)
    out = jax.block_until_ready(linear_regression_forward(x, weight, bias))
    ref = weight[0] * x + bias[0]
    assert out.shape == x.shape and out.dtype == x.dtype
    assert jnp.allclose(out, ref, atol=1e-6, rtol=1e-6)

    # Larger non-square shape: numel is a multiple of 512, so it takes the
    # zero-copy balanced-tile path (previously padded 1200 -> 2048 rows).
    x2 = jax.random.normal(jax.random.PRNGKey(1), (2048, 300), dtype=jnp.float32)
    out2 = jax.block_until_ready(linear_regression_forward(x2, weight, bias))
    ref2 = weight[0] * x2 + bias[0]
    assert out2.shape == x2.shape and out2.dtype == x2.dtype
    assert jnp.allclose(out2, ref2, atol=1e-6, rtol=1e-6)

    # Tiny ragged shape (numel % 512 != 0) exercising the pad fallback path.
    x3 = jax.random.normal(jax.random.PRNGKey(2), (7, 33), dtype=jnp.float32)
    out3 = jax.block_until_ready(linear_regression_forward(x3, weight, bias))
    ref3 = weight[0] * x3 + bias[0]
    assert out3.shape == x3.shape and out3.dtype == x3.dtype
    assert jnp.allclose(out3, ref3, atol=1e-6, rtol=1e-6)

    print("KERNEL_OK")
</pallas_src>

<mosaic_0001>
module attributes {stable_mosaic.version = 11 : i64} {
  func.func @_linreg_kernel(%arg0: i32, %arg1: memref<1xf32, #tpu.memory_space<smem>>, %arg2: memref<1xf32, #tpu.memory_space<smem>>, %arg3: memref<32x512xf32, #tpu.memory_space<vmem>>, %arg4: memref<32x512xf32, #tpu.memory_space<vmem>>) attributes {dimension_semantics = [#tpu.dimension_semantics<parallel>], iteration_bounds = array<i64: 1>, scalar_prefetch = 0 : i64, scratch_operands = 0 : i64, tpu.core_type = #tpu.core_type<tc>, window_params = [{transform_indices = @transform_0, window_bounds = array<i64: 1>}, {transform_indices = @transform_1, window_bounds = array<i64: 1>}, {transform_indices = @transform_2, window_bounds = array<i64: 32, 512>}, {transform_indices = @transform_3, window_bounds = array<i64: 32, 512>}]} {
    %c0 = arith.constant 0 : index
    %c0_0 = arith.constant 0 : index
    %0 = vector.load %arg3[%c0, %c0_0] : memref<32x512xf32, #tpu.memory_space<vmem>>, vector<32x512xf32>
    %c0_1 = arith.constant 0 : index
    %1 = memref.load %arg1[%c0_1] : memref<1xf32, #tpu.memory_space<smem>>
    %2 = vector.broadcast %1 : f32 to vector<32x512xf32>
    %3 = arith.mulf %2, %0 : vector<32x512xf32>
    %c0_2 = arith.constant 0 : index
    %4 = memref.load %arg2[%c0_2] : memref<1xf32, #tpu.memory_space<smem>>
    %5 = vector.broadcast %4 : f32 to vector<32x512xf32>
    %6 = arith.addf %3, %5 : vector<32x512xf32>
    %c0_3 = arith.constant 0 : index
    %c0_4 = arith.constant 0 : index
    %7 = vector.load %arg4[%c0_3, %c0_4] : memref<32x512xf32, #tpu.memory_space<vmem>>, vector<32x512xf32>
    tpu.vector_store %arg4[%c0_3, %c0_4], %6 {strides = array<i32>} : memref<32x512xf32, #tpu.memory_space<vmem>>, vector<32x512xf32>,
    return
  }
  func.func @transform_0(%arg0: i32) -> i32 {
    %c0_i32 = arith.constant 0 : i32
    %c0_i32_0 = arith.constant 0 : i32
    return %c0_i32 : i32
  }
  func.func @transform_1(%arg0: i32) -> i32 {
    %c0_i32 = arith.constant 0 : i32
    %c0_i32_0 = arith.constant 0 : i32
    return %c0_i32 : i32
  }
  func.func @transform_2(%arg0: i32) -> (i32, i32) {
    %c0_i32 = arith.constant 0 : i32
    %c0_i32_0 = arith.constant 0 : i32
    return %arg0, %c0_i32 : i32, i32
  }
  func.func @transform_3(%arg0: i32) -> (i32, i32) {
    %c0_i32 = arith.constant 0 : i32
    %c0_i32_0 = arith.constant 0 : i32
    return %arg0, %c0_i32 : i32, i32
  }
}

</mosaic_0001>

<llo_original>
// kernel: tpu_custom_call.1
$region0: #{tpu_custom_call.1}
  #allocation0 [shape = 'u32[]', space=smem, size = 0x4, offset = 0x4, fixed_abs, tag = 'smem constant byte address 0x4 - core index']
  #allocation1 [shape = 'u32[144,128]{1,0:T(1,128)}', space=vmem, size = 0x12000, scoped, tag = 'internal scratch']
  #allocation2 [shape = 'f32[1]{0:T(128)S(6)}', space=smem, size = 0x200, scoped, tag = 'scoped memory for tpu_custom_call.1']
  #allocation3 [shape = 'f32[1]{0:T(128)S(6)}', space=smem, size = 0x200, scoped, tag = 'scoped memory for tpu_custom_call.1']
  %s0 = inlined_call_operand.<no memory space> [shape: f32[1], index: 0, kind: input, shape index: {}]
  %s1 = inlined_call_operand.<no memory space> [shape: f32[1], index: 1, kind: input, shape index: {}]
  %s2 = inlined_call_operand.hbm [shape: f32[32,512], index: 2, kind: input, shape index: {}]
  %s3 = inlined_call_operand.hbm [shape: f32[32,512], index: 3, kind: output, shape index: {}]
  %s4 = sld [smem:[#allocation0]]
  $region26: #{tpu_custom_call.1} parent=0
    _
  %s6 = ssub.s32 1, %s4
  %s7 = scalar_select 0, %s6, %s4
  %8 = sst [smem:[#allocation2]] %s0
  %9 = sst [smem:[#allocation3]] %s1
  $region1: #{tpu_custom_call.1} parent=0
    #allocation4 [shape = 'u8[65536]{0}', space=vmem, size = 0x10000, scoped, tag = 'input window, operand 2, single buffered']
    #allocation5 [shape = 's32[1]{0}', space=sflag, size = 0x4, scoped, tag = 'scoped memory for tpu_custom_call.1']
    #allocation6 [shape = 's32[1]{0}', space=sflag, size = 0x4, scoped, tag = 'scoped memory for tpu_custom_call.1']
    #allocation7 [shape = 'u8[65536]{0}', space=vmem, size = 0x10000, scoped, tag = 'output window, operand 0, single buffered']
    %10 = vsyncpa [#allocation5], 0
    %11 = vsyncpa [#allocation6], 0
    // Predicated region
    $region2: #{tpu_custom_call.1} parent=1 // pred_check
      _
    $region3: #{tpu_custom_call.1} parent=1 // pred_check_branch
      %13 = sbr.rel (0) target = $region5
    $region4: #{tpu_custom_call.1} parent=1 // pred_region
      _
    $region5: #{tpu_custom_call.1} parent=1 // pred_fallthru
      _
    // Predicated region
    $region6: #{tpu_custom_call.1} parent=1 // pred_check
      _
    $region7: #{tpu_custom_call.1} parent=1 // pred_check_branch
      %15 = sbr.rel (0) target = $region9
    $region8: #{tpu_custom_call.1} parent=1 // pred_region
      _
    $region9: #{tpu_custom_call.1} parent=1 // pred_fallthru
      _
    // Predicated region
    $region10: #{tpu_custom_call.1} parent=1 // pred_check
      _
    $region11: #{tpu_custom_call.1} parent=1 // pred_check_branch
      %17 = sbr.rel (0) target = $region13
    $region12: #{tpu_custom_call.1} parent=1 // pred_region
      %s19 = ssub.s32 2048, 2048
      %20 = vsyncadd [#allocation5], %s19
      %s21 = sshll.u32 [#allocation4], 4
      %s22 = int_to_ptr.vmem [resolvable:$true] %s21
      %27 = dma.hbm_to_vmem [thread:$0]  %s2, 2048, %s22, [#allocation5], 512, 512, 32
    $region13: #{tpu_custom_call.1} parent=1 // pred_fallthru
      _
    // Predicated region
    $region14: #{tpu_custom_call.1} parent=1 // pred_check
      _
    $region15: #{tpu_custom_call.1} parent=1 // pred_check_branch
      %29 = sbr.rel (0) target = $region17
    $region16: #{tpu_custom_call.1} parent=1 // pred_region
      %30 = dma.done [#allocation5], 2048
    $region17: #{tpu_custom_call.1} parent=1 // pred_fallthru
      _
    %v31 = vld [vmem:[#allocation4] sm:$0xff]
    %v32 = vld [vmem:[#allocation4 + $0x8] sm:$0xff]
    %v33 = vld [vmem:[#allocation4 + $0x10] sm:$0xff]
    %v34 = vld [vmem:[#allocation4 + $0x18] sm:$0xff]
    %v35 = vld [vmem:[#allocation4 + $0x20] sm:$0xff]
    %v36 = vld [vmem:[#allocation4 + $0x28] sm:$0xff]
    %v37 = vld [vmem:[#allocation4 + $0x30] sm:$0xff]
    %v38 = vld [vmem:[#allocation4 + $0x38] sm:$0xff]
    %v39 = vld [vmem:[#allocation4 + $0x40] sm:$0xff]
    %v40 = vld [vmem:[#allocation4 + $0x48] sm:$0xff]
    %v41 = vld [vmem:[#allocation4 + $0x50] sm:$0xff]
    %v42 = vld [vmem:[#allocation4 + $0x58] sm:$0xff]
    %v43 = vld [vmem:[#allocation4 + $0x60] sm:$0xff]
    %v44 = vld [vmem:[#allocation4 + $0x68] sm:$0xff]
    %v45 = vld [vmem:[#allocation4 + $0x70] sm:$0xff]
    %v46 = vld [vmem:[#allocation4 + $0x78] sm:$0xff]
    %s47 = sld [smem:[#allocation2]]
    %v48 = vstv %s47
    %v49 = vmul.f32 %v48, %v31
    %v50 = vmul.f32 %v48, %v32
    %v51 = vmul.f32 %v48, %v33
    %v52 = vmul.f32 %v48, %v34
    %v53 = vmul.f32 %v48, %v35
    %v54 = vmul.f32 %v48, %v36
    %v55 = vmul.f32 %v48, %v37
    %v56 = vmul.f32 %v48, %v38
    %v57 = vmul.f32 %v48, %v39
    %v58 = vmul.f32 %v48, %v40
    %v59 = vmul.f32 %v48, %v41
    %v60 = vmul.f32 %v48, %v42
    %v61 = vmul.f32 %v48, %v43
    %v62 = vmul.f32 %v48, %v44
    %v63 = vmul.f32 %v48, %v45
    %v64 = vmul.f32 %v48, %v46
    %s65 = sld [smem:[#allocation3]]
    %v66 = vstv %s65
    %v67 = vadd.f32 %v49, %v66
    %v68 = vadd.f32 %v50, %v66
    %v69 = vadd.f32 %v51, %v66
    %v70 = vadd.f32 %v52, %v66
    %v71 = vadd.f32 %v53, %v66
    %v72 = vadd.f32 %v54, %v66
    %v73 = vadd.f32 %v55, %v66
    %v74 = vadd.f32 %v56, %v66
    %v75 = vadd.f32 %v57, %v66
    %v76 = vadd.f32 %v58, %v66
    %v77 = vadd.f32 %v59, %v66
    %v78 = vadd.f32 %v60, %v66
    %v79 = vadd.f32 %v61, %v66
    %v80 = vadd.f32 %v62, %v66
    %v81 = vadd.f32 %v63, %v66
    %v82 = vadd.f32 %v64, %v66
    %83 = vst [vmem:[#allocation7] sm:$0xff] %v67
    %84 = vst [vmem:[#allocation7 + $0x8] sm:$0xff] %v68
    %85 = vst [vmem:[#allocation7 + $0x10] sm:$0xff] %v69
    %86 = vst [vmem:[#allocation7 + $0x18] sm:$0xff] %v70
    %87 = vst [vmem:[#allocation7 + $0x20] sm:$0xff] %v71
    %88 = vst [vmem:[#allocation7 + $0x28] sm:$0xff] %v72
    %89 = vst [vmem:[#allocation7 + $0x30] sm:$0xff] %v73
    %90 = vst [vmem:[#allocation7 + $0x38] sm:$0xff] %v74
    %91 = vst [vmem:[#allocation7 + $0x40] sm:$0xff] %v75
    %92 = vst [vmem:[#allocation7 + $0x48] sm:$0xff] %v76
    %93 = vst [vmem:[#allocation7 + $0x50] sm:$0xff] %v77
    %94 = vst [vmem:[#allocation7 + $0x58] sm:$0xff] %v78
    %95 = vst [vmem:[#allocation7 + $0x60] sm:$0xff] %v79
    %96 = vst [vmem:[#allocation7 + $0x68] sm:$0xff] %v80
    %97 = vst [vmem:[#allocation7 + $0x70] sm:$0xff] %v81
    %98 = vst [vmem:[#allocation7 + $0x78] sm:$0xff] %v82
    // Predicated region
    $region18: #{tpu_custom_call.1} parent=1 // pred_check
      _
    $region19: #{tpu_custom_call.1} parent=1 // pred_check_branch
      %100 = sbr.rel (0) target = $region21
    $region20: #{tpu_custom_call.1} parent=1 // pred_region
      %s102 = ssub.s32 2048, 2048
      %103 = vsyncadd [#allocation6], %s102
      %s104 = sshll.u32 [#allocation7], 4
      %s105 = int_to_ptr.vmem [resolvable:$true] %s104
      %110 = dma.vmem_to_hbm [thread:$0]  %s105, 2048, %s3, [#allocation6], 512, 512, 32
    $region21: #{tpu_custom_call.1} parent=1 // pred_fallthru
      _
    // Predicated region
    $region22: #{tpu_custom_call.1} parent=1 // pred_check
      _
    $region23: #{tpu_custom_call.1} parent=1 // pred_check_branch
      %112 = sbr.rel (0) target = $region25
    $region24: #{tpu_custom_call.1} parent=1 // pred_region
      %113 = dma.done [#allocation6], 2048
    $region25: #{tpu_custom_call.1} parent=1 // pred_fallthru
      _
    %114 = vsyncpa [#allocation5], 1
    %115 = vsyncpa [#allocation6], 1

</llo_original>
